<compile_context>
chip_gen: v7x
topology: tpu7x:2x2x1
jax: 0.10.0
libtpu: 0.0.40
codegen_flags: <defaults>
</compile_context>

<pallas_src>
import math

import jax
import jax.numpy as jnp
from jax.experimental import pallas as pl
from jax.experimental.pallas import tpu as pltpu


def _parallel_decoders_kernel(x_ref, w_ref, b_ref, o_ref):
    # x_ref: [TM, D], w_ref: [D, C_pad], b_ref: [1, C_pad], o_ref: [TM, C_pad]
    acc = jnp.dot(x_ref[...], w_ref[...], preferred_element_type=jnp.float32)
    o_ref[...] = (acc + b_ref[...]).astype(o_ref.dtype)


def parallel_linear_decoders(x, weights, biases, *, tm=512):
    """Pallas equivalent of ParallelLinearDecoders.forward.

    x:       [..., D] float array.
    weights: list of [D, out_i] arrays (nn.Linear weight, already transposed).
    biases:  list of [out_i] arrays.
    Returns a list of arrays [..., out_i], one per decoder.
    """
    D = int(x.shape[-1])
    out_sizes = [int(w.shape[1]) for w in weights]
    C_total = sum(out_sizes)
    C_pad = max(128, pl.cdiv(C_total, 128) * 128)  # lane-dense fused output width

    # Fuse all decoders into one weight / bias (zero-pad the extra lanes).
    w_cat = jnp.concatenate(weights, axis=1).astype(x.dtype)
    b_cat = jnp.concatenate(biases, axis=0).astype(jnp.float32)
    if C_pad != C_total:
        w_cat = jnp.pad(w_cat, ((0, 0), (0, C_pad - C_total)))
        b_cat = jnp.pad(b_cat, (0, C_pad - C_total))
    b_cat = b_cat.reshape(1, C_pad)

    lead = x.shape[:-1]
    M = int(math.prod(lead)) if lead else 1
    x2 = x.reshape(M, D)

    # Row tiling: multiple of 8 sublanes, capped at `tm` rows per step.
    M8 = pl.cdiv(M, 8) * 8
    TM = min(tm, M8)
    M_pad = pl.cdiv(M8, TM) * TM
    if M_pad != M:
        x2 = jnp.pad(x2, ((0, M_pad - M), (0, 0)))

    itemsize = jnp.dtype(x.dtype).itemsize
    fused = pl.pallas_call(
        _parallel_decoders_kernel,
        out_shape=jax.ShapeDtypeStruct((M_pad, C_pad), x.dtype),
        grid=(M_pad // TM,),
        in_specs=[
            pl.BlockSpec((TM, D), lambda i: (i, 0)),      # x tile (pipelined over rows)
            pl.BlockSpec((D, C_pad), lambda i: (0, 0)),   # fused weights (VMEM-resident)
            pl.BlockSpec((1, C_pad), lambda i: (0, 0)),   # fused bias (VMEM-resident)
        ],
        out_specs=pl.BlockSpec((TM, C_pad), lambda i: (i, 0)),
        compiler_params=pltpu.CompilerParams(
            dimension_semantics=("parallel",),            # independent rows -> both TCs on v7x
        ),
        cost_estimate=pl.CostEstimate(
            flops=2 * M_pad * D * C_pad,
            transcendentals=0,
            bytes_accessed=(M_pad * D + D * C_pad + M_pad * C_pad) * itemsize,
        ),
    )(x2, w_cat, b_cat)

    # Split the fused output back into the per-decoder list (matches the nn.ModuleList).
    outputs = []
    off = 0
    for sz in out_sizes:
        outputs.append(fused[:M, off:off + sz].reshape(*lead, sz))
        off += sz
    return outputs


if __name__ == "__main__":
    # Small shapes consistent with the module: batch=2, seq=8, input_size=32,
    # three parallel decoders with output sizes [4, 8, 16].
    B, L, D = 2, 8, 32
    output_sizes = [4, 8, 16]

    key = jax.random.PRNGKey(0)
    k_x, *k_params = jax.random.split(key, 1 + 2 * len(output_sizes))

    x = jax.random.normal(k_x, (B, L, D), dtype=jnp.float32)

    # nn.Linear default init: U(-1/sqrt(in), 1/sqrt(in)); weights stored as [D, out]
    # (i.e. already transposed relative to PyTorch's [out, in]).
    bound = 1.0 / (D ** 0.5)
    weights, biases = [], []
    for idx, out_sz in enumerate(output_sizes):
        kw, kb = k_params[2 * idx], k_params[2 * idx + 1]
        weights.append(jax.random.uniform(kw, (D, out_sz), jnp.float32, -bound, bound))
        biases.append(jax.random.uniform(kb, (out_sz,), jnp.float32, -bound, bound))

    outs = parallel_linear_decoders(x, weights, biases)
    jax.block_until_ready(outs)

    # Pure-JAX reference: each decoder is x @ W_i + b_i.
    for o, w, b, out_sz in zip(outs, weights, biases, output_sizes):
        ref = x @ w + b
        assert o.shape == (B, L, out_sz), (o.shape, (B, L, out_sz))
        assert jnp.allclose(o, ref, atol=1e-4, rtol=1e-4)

    print("KERNEL_OK")
</pallas_src>

<mosaic_0001>
module attributes {stable_mosaic.version = 11 : i64} {
  func.func @_parallel_decoders_kernel(%arg0: i32, %arg1: memref<16x32xf32, #tpu.memory_space<vmem>>, %arg2: memref<32x128xf32, #tpu.memory_space<vmem>>, %arg3: memref<1x128xf32, #tpu.memory_space<vmem>>, %arg4: memref<16x128xf32, #tpu.memory_space<vmem>>) attributes {dimension_semantics = [#tpu.dimension_semantics<parallel>], iteration_bounds = array<i64: 1>, scalar_prefetch = 0 : i64, scratch_operands = 0 : i64, tpu.core_type = #tpu.core_type<tc>, window_params = [{transform_indices = @transform_0, window_bounds = array<i64: 16, 32>}, {pipeline_mode = #tpu.pipeline_mode<synchronous>, transform_indices = @transform_1, window_bounds = array<i64: 32, 128>}, {pipeline_mode = #tpu.pipeline_mode<synchronous>, transform_indices = @transform_2, window_bounds = array<i64: 1, 128>}, {transform_indices = @transform_3, window_bounds = array<i64: 16, 128>}]} {
    %c0 = arith.constant 0 : index
    %c0_0 = arith.constant 0 : index
    %0 = vector.load %arg1[%c0, %c0_0] : memref<16x32xf32, #tpu.memory_space<vmem>>, vector<16x32xf32>
    %c0_1 = arith.constant 0 : index
    %c0_2 = arith.constant 0 : index
    %1 = vector.load %arg2[%c0_1, %c0_2] : memref<32x128xf32, #tpu.memory_space<vmem>>, vector<32x128xf32>
    %cst = arith.constant dense<0.000000e+00> : vector<16x128xf32>
    %2 = tpu.matmul %0, %1, %cst {dimension_numbers = #tpu.dot_dimension_numbers<[1], [0], [0], [1], [0, 0, 1, 1], [], []>} : vector<16x32xf32>, vector<32x128xf32>, vector<16x128xf32> -> vector<16x128xf32>
    %c0_3 = arith.constant 0 : index
    %c0_4 = arith.constant 0 : index
    %3 = vector.load %arg3[%c0_3, %c0_4] : memref<1x128xf32, #tpu.memory_space<vmem>>, vector<1x128xf32>
    %4 = vector.broadcast %3 : vector<1x128xf32> to vector<16x128xf32>
    %5 = arith.addf %2, %4 : vector<16x128xf32>
    %c0_5 = arith.constant 0 : index
    %c0_6 = arith.constant 0 : index
    %6 = vector.load %arg4[%c0_5, %c0_6] : memref<16x128xf32, #tpu.memory_space<vmem>>, vector<16x128xf32>
    tpu.vector_store %arg4[%c0_5, %c0_6], %5 {strides = array<i32>} : memref<16x128xf32, #tpu.memory_space<vmem>>, vector<16x128xf32>,
    return
  }
  func.func @transform_0(%arg0: i32) -> (i32, i32) {
    %c0_i32 = arith.constant 0 : i32
    %c0_i32_0 = arith.constant 0 : i32
    return %arg0, %c0_i32 : i32, i32
  }
  func.func @transform_1(%arg0: i32) -> (i32, i32) {
    %c0_i32 = arith.constant 0 : i32
    %c0_i32_0 = arith.constant 0 : i32
    %c0_i32_1 = arith.constant 0 : i32
    return %c0_i32, %c0_i32_0 : i32, i32
  }
  func.func @transform_2(%arg0: i32) -> (i32, i32) {
    %c0_i32 = arith.constant 0 : i32
    %c0_i32_0 = arith.constant 0 : i32
    %c0_i32_1 = arith.constant 0 : i32
    return %c0_i32, %c0_i32_0 : i32, i32
  }
  func.func @transform_3(%arg0: i32) -> (i32, i32) {
    %c0_i32 = arith.constant 0 : i32
    %c0_i32_0 = arith.constant 0 : i32
    return %arg0, %c0_i32 : i32, i32
  }
}

</mosaic_0001>

<llo_original>
// kernel: tpu_custom_call.1
$region0: #{tpu_custom_call.1}
  #allocation0 [shape = 'u32[]', space=smem, size = 0x4, offset = 0x4, fixed_abs, tag = 'smem constant byte address 0x4 - core index']
  #allocation1 [shape = 'u32[144,128]{1,0:T(1,128)}', space=vmem, size = 0x12000, scoped, tag = 'internal scratch']
  %s0 = inlined_call_operand.hbm [shape: f32[16,32], index: 0, kind: input, shape index: {}]
  %s1 = inlined_call_operand.hbm [shape: f32[32,128], index: 1, kind: input, shape index: {}]
  %s2 = inlined_call_operand.vmem [shape: f32[1,128], index: 2, kind: input, shape index: {}]
  %s3 = inlined_call_operand.hbm [shape: f32[16,128], index: 3, kind: output, shape index: {}]
  %s4 = sld [smem:[#allocation0]]
  $region30: #{tpu_custom_call.1} parent=0
    _
  %s6 = ssub.s32 1, %s4
  %s7 = scalar_select 0, %s6, %s4
  $region1: #{tpu_custom_call.1} parent=0
    #allocation2 [shape = 'u8[8192]{0}', space=vmem, size = 0x2000, scoped, tag = 'input window, operand 0, single buffered']
    #allocation3 [shape = 's32[1]{0}', space=sflag, size = 0x4, scoped, tag = 'scoped memory for tpu_custom_call.1']
    #allocation4 [shape = 's32[1]{0}', space=sflag, size = 0x4, scoped, tag = 'scoped memory for tpu_custom_call.1']
    #allocation5 [shape = 'u8[16384]{0}', space=vmem, size = 0x4000, scoped, tag = 'input window, operand 1, single buffered']
    #allocation6 [shape = 's32[1]{0}', space=sflag, size = 0x4, scoped, tag = 'scoped memory for tpu_custom_call.1']
    #allocation7 [shape = 'u8[8192]{0}', space=vmem, size = 0x2000, scoped, tag = 'output window, operand 0, single buffered']
    %8 = vsyncpa [#allocation3], 0
    %9 = vsyncpa [#allocation6], 0
    %10 = vsyncpa [#allocation4], 0
    // Predicated region
    $region2: #{tpu_custom_call.1} parent=1 // pred_check
      _
    $region3: #{tpu_custom_call.1} parent=1 // pred_check_branch
      %12 = sbr.rel (0) target = $region5
    $region4: #{tpu_custom_call.1} parent=1 // pred_region
      %s14 = ssub.s32 256, 256
      %15 = vsyncadd [#allocation3], %s14
      %s16 = sshll.u32 [#allocation2], 4
      %s17 = int_to_ptr.vmem [resolvable:$true] %s16
      %22 = dma.hbm_to_vmem [thread:$0]  %s0, 256, %s17, [#allocation3], 128, 128, 8
    $region5: #{tpu_custom_call.1} parent=1 // pred_fallthru
      _
    // Predicated region
    $region6: #{tpu_custom_call.1} parent=1 // pred_check
      _
    $region7: #{tpu_custom_call.1} parent=1 // pred_check_branch
      %24 = sbr.rel (0) target = $region9
    $region8: #{tpu_custom_call.1} parent=1 // pred_region
      %s26 = ssub.s32 512, 512
      %27 = vsyncadd [#allocation6], %s26
      %s28 = sshll.u32 [#allocation5], 4
      %s29 = int_to_ptr.vmem [resolvable:$true] %s28
      %34 = dma.hbm_to_vmem [thread:$0]  %s1, 512, %s29, [#allocation6], 128, 128, 8
    $region9: #{tpu_custom_call.1} parent=1 // pred_fallthru
      _
    // Predicated region
    $region10: #{tpu_custom_call.1} parent=1 // pred_check
      _
    $region11: #{tpu_custom_call.1} parent=1 // pred_check_branch
      %36 = sbr.rel (0) target = $region13
    $region12: #{tpu_custom_call.1} parent=1 // pred_region
      _
    $region13: #{tpu_custom_call.1} parent=1 // pred_fallthru
      _
    // Predicated region
    $region14: #{tpu_custom_call.1} parent=1 // pred_check
      _
    $region15: #{tpu_custom_call.1} parent=1 // pred_check_branch
      %38 = sbr.rel (0) target = $region17
    $region16: #{tpu_custom_call.1} parent=1 // pred_region
      %39 = dma.done [#allocation3], 256
    $region17: #{tpu_custom_call.1} parent=1 // pred_fallthru
      _
    // Predicated region
    $region18: #{tpu_custom_call.1} parent=1 // pred_check
      _
    $region19: #{tpu_custom_call.1} parent=1 // pred_check_branch
      %41 = sbr.rel (0) target = $region21
    $region20: #{tpu_custom_call.1} parent=1 // pred_region
      %42 = dma.done [#allocation6], 512
    $region21: #{tpu_custom_call.1} parent=1 // pred_fallthru
      _
    %v43 = vld [vmem:[#allocation2] sm:$0xff]
    %v44 = vld [vmem:[#allocation2 + $0x8] sm:$0xff]
    %v45 = vld [vmem:[#allocation5] sm:$0xff]
    %v46 = vld [vmem:[#allocation5 + $0x8] sm:$0xff]
    %v47 = vld [vmem:[#allocation5 + $0x10] sm:$0xff]
    %v48 = vld [vmem:[#allocation5 + $0x18] sm:$0xff]
    %v49 = vld [vmem:[%s2] sm:$0x1]
    %v51 = vlaneseq
    %v52 = vshrl.u32 %v51, 7
    %v53 = vsub.s32 0, %v52
    %v54 = vrot.slane %v49, %v53
    %vm56 = vcmask 261120
    %v58 = vsel %vm56, %v43, 0
    %v61 = vsel %vm56, %v44, 0
    %63 = vmatprep.subr.mxu0 0.0
    %64 = vmatpush1.msra.mxu0 %v45
    %65 = vmatprep.subr.mxu0 0.0
    %66 = vmatpush1.msra.mxu0 %v46
    %67 = vmatprep.subr.mxu0 0.0
    %68 = vmatpush1.msra.mxu0 %v47
    %69 = vmatprep.subr.mxu0 0.0
    %70 = vmatpush1.msra.mxu0 %v48
    %71 = vmatprep.subr.mxu0 0.0
    %72 = vmatpush1.msra.mxu0 0.0
    %73 = vmatprep.subr.mxu0 0.0
    %74 = vmatpush1.msra.mxu0 0.0
    %75 = vmatprep.subr.mxu0 0.0
    %76 = vmatpush1.msra.mxu0 0.0
    %77 = vmatprep.subr.mxu0 0.0
    %78 = vmatpush1.msra.mxu0 0.0
    %79 = vmatprep.subr.mxu0 0.0
    %80 = vmatpush1.msra.mxu0 0.0
    %81 = vmatprep.subr.mxu0 0.0
    %82 = vmatpush1.msra.mxu0 0.0
    %83 = vmatprep.subr.mxu0 0.0
    %84 = vmatpush1.msra.mxu0 0.0
    %85 = vmatprep.subr.mxu0 0.0
    %86 = vmatpush1.msra.mxu0 0.0
    %87 = vmatprep.subr.mxu0 0.0
    %88 = vmatpush1.msra.mxu0 0.0
    %89 = vmatprep.subr.mxu0 0.0
    %90 = vmatpush1.msra.mxu0 0.0
    %91 = vmatprep.subr.mxu0 0.0
    %92 = vmatpush1.msra.mxu0 0.0
    %93 = vmatprep.subr.mxu0 0.0
    %94 = vmatpush1.msra.mxu0 0.0
    %95 = vmatprep.subr.mxu0 0.0
    %96 = vmatpush1.msra.mxu0 0.0
    %97 = vmatprep.subr.mxu0 0.0
    %98 = vmatpush1.msra.mxu0 0.0
    %99 = vmatprep.subr.mxu0 0.0
    %100 = vmatpush1.msra.mxu0 0.0
    %101 = vmatprep.subr.mxu0 0.0
    %102 = vmatpush1.msra.mxu0 0.0
    %103 = vmatprep.subr.mxu0 0.0
    %104 = vmatpush1.msra.mxu0 0.0
    %105 = vmatprep.subr.mxu0 0.0
    %106 = vmatpush1.msra.mxu0 0.0
    %107 = vmatprep.subr.mxu0 0.0
    %108 = vmatpush1.msra.mxu0 0.0
    %109 = vmatprep.subr.mxu0 0.0
    %110 = vmatpush1.msra.mxu0 0.0
    %111 = vmatprep.subr.mxu0 0.0
    %112 = vmatpush1.msra.mxu0 0.0
    %113 = vmatprep.subr.mxu0 0.0
    %114 = vmatpush1.msra.mxu0 0.0
    %115 = vmatprep.subr.mxu0 0.0
    %116 = vmatpush1.msra.mxu0 0.0
    %117 = vmatprep.subr.mxu0 0.0
    %118 = vmatpush1.msra.mxu0 0.0
    %119 = vmatprep.subr.mxu0 0.0
    %120 = vmatpush1.msra.mxu0 0.0
    %121 = vmatprep.subr.mxu0 0.0
    %122 = vmatpush1.msra.mxu0 0.0
    %123 = vmatprep.subr.mxu0 0.0
    %124 = vmatpush1.msra.mxu0 0.0
    %125 = vmatprep.subr.mxu0 0.0
    %126 = vmatpush1.msra.mxu0 0.0
    %127 = vmatprep.mubr.f32.mxu0 0.0
    %128 = vmatmul.mubr.f32.gmra.mrb[0].mxu0 %v58
    %v129 = vpop.f32.mrb[0].mxu0
    %v130 = vadd.f32 %v54, %v129
    %v131 = vpop.f32.mrb[0].mxu0
    %132 = vmatprep.mubr.f32.mxu0 0.0
    %133 = vmatmul.mubr.f32.gmra.mrb[0].mxu0 %v61
    %v134 = vpop.f32.mrb[0].mxu0
    %v135 = vadd.f32 %v54, %v134
    %v136 = vpop.f32.mrb[0].mxu0
    %137 = vdwg.mxu0
    %138 = vst [vmem:[#allocation7] sm:$0xff] %v130
    %139 = vst [vmem:[#allocation7 + $0x8] sm:$0xff] %v135
    // Predicated region
    $region22: #{tpu_custom_call.1} parent=1 // pred_check
      _
    $region23: #{tpu_custom_call.1} parent=1 // pred_check_branch
      %141 = sbr.rel (0) target = $region25
    $region24: #{tpu_custom_call.1} parent=1 // pred_region
      %s143 = ssub.s32 256, 256
      %144 = vsyncadd [#allocation4], %s143
      %s145 = sshll.u32 [#allocation7], 4
      %s146 = int_to_ptr.vmem [resolvable:$true] %s145
      %151 = dma.vmem_to_hbm [thread:$0]  %s146, 256, %s3, [#allocation4], 128, 128, 8
    $region25: #{tpu_custom_call.1} parent=1 // pred_fallthru
      _
    // Predicated region
    $region26: #{tpu_custom_call.1} parent=1 // pred_check
      _
    $region27: #{tpu_custom_call.1} parent=1 // pred_check_branch
      %153 = sbr.rel (0) target = $region29
    $region28: #{tpu_custom_call.1} parent=1 // pred_region
      %154 = dma.done [#allocation4], 256
    $region29: #{tpu_custom_call.1} parent=1 // pred_fallthru
      _
    %155 = vsyncpa [#allocation3], 1
    %156 = vsyncpa [#allocation6], 1
    %157 = vsyncpa [#allocation4], 1

</llo_original>
